<compile_context>
chip_gen: v5e
topology: v5e:2x2
jax: 0.10.0
libtpu: 0.0.40
codegen_flags: <defaults>
</compile_context>

<pallas_src>
import jax
import jax.numpy as jnp
from jax import lax
from jax.experimental import pallas as pl
from jax.experimental.pallas import tpu as pltpu


def _round_up(x, m):
    return ((x + m - 1) // m) * m


def _vmem_capacity_bytes():
    # Trace-time hardware query only; fall back to the smallest current chip
    # (v7x: 64 MiB per TensorCore) if the query is unavailable.
    try:
        return int(pltpu.get_tpu_info().vmem_capacity_bytes)
    except Exception:  # narrow purpose: hardware query fallback, not error hiding
        return 64 * 1024 * 1024


def _vmem_bytes(tn, tt, d, e, in_bytes=2, out_bytes=4):
    """Explicit per-grid-step VMEM footprint estimate."""
    x_bufs = 2 * tn * tt * d * in_bytes       # double-buffered input tile [tn, Tt, D] bf16
    w_bufs = 2 * d * e * in_bytes             # double-buffered resident projection [D, E] bf16
    o_bufs = 2 * tn * e * out_bytes           # double-buffered output tile [tn, E] f32
    acc = tn * e * 4                          # f32 accumulator scratch
    interm = 2 * tn * tt * e * 4              # feats + (feats*inv) f32 temporaries
    return x_bufs + w_bufs + o_bufs + acc + interm


def _derive_tiling(n, t, d, e, budget):
    """Pick (tn, Tt) — largest tiles that fit `budget` per the formula above."""
    n8 = _round_up(n, 8)
    # Noun tile: multiple of 8 (f32 output-block sublane), capped at 512 (per-step
    # pipeline overhead amortized by then), and small enough that the parallel
    # noun axis gets >= 2 grid steps when there is enough work (v7x megacore,
    # DMA/compute overlap everywhere).
    tn_hi = min(512, n8)
    if n8 >= 16:
        tn_hi = min(tn_hi, _round_up(n8 // 2, 8))
    # Template chunk: prefer the full T (one contiguous noun-major DMA slab, no
    # accumulation loop); otherwise the largest multiple-of-16 divisor of T
    # (bf16 sublane packing keeps the (tn, Tt, D) -> (tn*Tt, D) collapse clean).
    tt_cands = [t] + [c for c in range((t // 16) * 16, 0, -16) if t % c == 0 and c != t]
    for tn in range(tn_hi, 0, -8):            # largest-first keeps Tt*tn (MXU M) big
        for tt in tt_cands:
            if _vmem_bytes(tn, tt, d, e) <= budget:
                return tn, tt
    return 8, tt_cands[-1]                    # minimal legal tiles


# ---------------------------------------------------------------------------
# Kernel: grid = (noun tiles [parallel], template chunks [arbitrary]).
# One grid step: (tn*Tt, D) @ (D, E) MXU matmul, per-row L2 norm folded into
# the template-ensemble accumulation; final renorm + store on the last chunk.
# ---------------------------------------------------------------------------
def _prompt_ensemble_kernel(x_ref, w_ref, o_ref, acc_ref):
    """x_ref:   [tn, Tt, D] bf16  pooled (EOT) features, noun-major
       w_ref:   [D,  E]     bf16  CLIP text projection (D, E lane-padded)
       o_ref:   [tn, E]     f32   ensembled + renormalized text features
       acc_ref: [tn, E]     f32   VMEM accumulator (resident across T chunks)
    """
    t = pl.program_id(1)

    @pl.when(t == 0)
    def _():
        acc_ref[...] = jnp.zeros_like(acc_ref)

    tn, tt, d = x_ref.shape
    e = w_ref.shape[1]

    # Fold the template chunk into the matmul M dimension: one big MXU matmul.
    x = x_ref[...].reshape(tn * tt, d)
    feats = jnp.dot(x, w_ref[...], preferred_element_type=jnp.float32)  # [tn*Tt, E] f32

    # Per-(noun, template) L2 normalization folded directly into the template
    # accumulation (no separate `normed` tile).  The eps guard only changes
    # all-zero padding rows that are sliced off after the call; real rows are
    # never zero, so this matches the reference's raw-norm divide.
    sq = jnp.sum(feats * feats, axis=-1, keepdims=True)
    inv = lax.rsqrt(jnp.maximum(sq, 1e-30))
    acc_ref[...] += jnp.sum((feats * inv).reshape(tn, tt, e), axis=1)

    @pl.when(t == pl.num_programs(1) - 1)
    def _():
        # Ensemble over templates.  Mean-then-renorm == sum-then-renorm (L2 norm
        # is scale invariant), so the divide by T is skipped.
        acc = acc_ref[...]
        s = jnp.sum(acc * acc, axis=-1, keepdims=True)
        o_ref[...] = (acc * lax.rsqrt(jnp.maximum(s, 1e-30))).astype(o_ref.dtype)
        # TODO(synk): emit bf16 here if downstream tolerates it (halves store
        # bytes; helps v5e's single vector-store slot).


@jax.jit
def prompt_extractor_forward(pooled_feats, text_projection):
    """pooled_feats: [N, T, D] noun-major pooled EOT features (ideally bf16),
       text_projection: [D, E].  Returns [N, E] f32 ensembled text features."""
    N, T, D = pooled_feats.shape
    D2, E = text_projection.shape
    assert D == D2

    # Lane / MXU-K alignment: pad D and E up to multiples of 128.  Real CLIP
    # dims (512/768) already satisfy this, so these pads are usually no-ops.
    D_pad = _round_up(D, 128)
    E_pad = _round_up(E, 128)

    vmem_cap = _vmem_capacity_bytes()
    budget = vmem_cap - 16 * 1024 * 1024      # headroom for compiler scratch/spills
    tn, Tt = _derive_tiling(N, T, D_pad, E_pad, budget)
    N_pad = _round_up(N, tn)

    # bf16 at the MXU boundary; accumulation and all VPU/EUP math stay f32.
    # The demo producer already emits bf16 noun-major features, so the cast is
    # a no-op; any remaining cast/pad fuses under this jit.
    # TODO(synk): a real CLIP text encoder should emit bf16 pooled features with
    # N a multiple of the noun tile to avoid any pre-kernel HBM pass.
    x = pooled_feats.astype(jnp.bfloat16)
    w = text_projection.astype(jnp.bfloat16)
    if N_pad != N or D_pad != D:
        x = jnp.pad(x, ((0, N_pad - N), (0, 0), (0, D_pad - D)))
    if D_pad != D or E_pad != E:
        w = jnp.pad(w, ((0, D_pad - D), (0, E_pad - E)))

    vmem_limit = min(vmem_cap,
                     max(_vmem_bytes(tn, Tt, D_pad, E_pad) + 8 * 1024 * 1024,
                         32 * 1024 * 1024))

    out = pl.pallas_call(
        _prompt_ensemble_kernel,
        out_shape=jax.ShapeDtypeStruct((N_pad, E_pad), jnp.float32),
        grid_spec=pltpu.PrefetchScalarGridSpec(
            num_scalar_prefetch=0,
            grid=(N_pad // tn, T // Tt),
            in_specs=[
                pl.BlockSpec((tn, Tt, D_pad), lambda n, t: (n, t, 0)),
                pl.BlockSpec((D_pad, E_pad), lambda n, t: (0, 0)),
            ],
            out_specs=pl.BlockSpec((tn, E_pad), lambda n, t: (n, 0)),
            scratch_shapes=[pltpu.VMEM((tn, E_pad), jnp.float32)],
        ),
        compiler_params=pltpu.CompilerParams(
            # Noun tiles independent -> shard across v7x's 2 TensorCores;
            # template chunks are the reduction axis (resident output).
            dimension_semantics=("parallel", "arbitrary"),
            vmem_limit_bytes=int(vmem_limit),
        ),
    )(x, w)

    return out[:N, :E]


# ---------------------------------------------------------------------------
# Glue: synthetic "clip_model" (deterministic params) + tokenization/pooling.
# ---------------------------------------------------------------------------
def build_synthetic_clip(key, vocab=64, seq_len=8, dim=32, embed=32):
    k1, k2, k3 = jax.random.split(key, 3)
    token_embedding = jax.random.normal(k1, (vocab, dim), jnp.float32) * 0.02
    positional_embedding = jax.random.normal(k2, (seq_len, dim), jnp.float32) * 0.01
    text_projection = jax.random.normal(k3, (dim, embed), jnp.float32) * (dim ** -0.5)
    return dict(token_embedding=token_embedding,
                positional_embedding=positional_embedding,
                text_projection=text_projection,
                vocab=vocab, seq_len=seq_len)


def tokenize_and_pool(noun_ids, n_templates, clip):
    """Deterministic stand-in for clip.tokenize + encode_text up to pooling.

    Emits noun-major bf16 pooled EOT-position features, shape [N, T, D] —
    the layout/dtype the kernel wants, so no extra HBM cast/transpose pass.
    """
    vocab, L = clip["vocab"], clip["seq_len"]
    n_idx = noun_ids[:, None, None]                            # [N,1,1]
    t_idx = jnp.arange(n_templates)[None, :, None]             # [1,T,1]
    pos = jnp.arange(L)[None, None, :]                         # [1,1,L]
    token_ids = (n_idx * 7 + t_idx * 13 + pos) % vocab         # [N,T,L] int
    x = clip["token_embedding"][token_ids] + clip["positional_embedding"][None, None]
    pooled = x[:, :, -1, :]                                    # EOT position -> [N,T,D]
    return pooled.astype(jnp.bfloat16)


def reference_forward(pooled_bf16, proj):
    # Same bf16 boundary quantization as the kernel; math in f32.
    pooled = pooled_bf16.astype(jnp.float32)
    proj = proj.astype(jnp.bfloat16).astype(jnp.float32)
    feats = jnp.einsum("ntd,de->nte", pooled, proj)
    feats = feats / jnp.linalg.norm(feats, axis=-1, keepdims=True)
    mean = feats.mean(axis=1)
    return mean / jnp.linalg.norm(mean, axis=-1, keepdims=True)


if __name__ == "__main__":
    key = jax.random.PRNGKey(0)
    k_clip, k_nouns = jax.random.split(key)

    N_NOUNS, N_TEMPLATES = 8, 2
    clip = build_synthetic_clip(k_clip, vocab=64, seq_len=8, dim=32, embed=32)

    # "noun_list" -> deterministic integer ids (stand-in for string tokenization)
    noun_ids = jax.random.randint(k_nouns, (N_NOUNS,), 0, clip["vocab"])

    pooled = tokenize_and_pool(noun_ids, N_TEMPLATES, clip)           # [N, T, D] bf16
    out = prompt_extractor_forward(pooled, clip["text_projection"])   # [N, E] f32
    out = jax.block_until_ready(out)

    ref = reference_forward(pooled, clip["text_projection"])
    assert out.shape == (N_NOUNS, clip["text_projection"].shape[1])
    err = float(jnp.max(jnp.abs(out - ref)))
    assert jnp.allclose(out, ref, atol=1e-3, rtol=1e-3), err

    print("KERNEL_OK")
</pallas_src>

<mosaic_0001>
module attributes {stable_mosaic.version = 11 : i64} {
  func.func @_prompt_ensemble_kernel(%arg0: i32, %arg1: i32, %arg2: memref<8x2x128xbf16, #tpu.memory_space<vmem>>, %arg3: memref<128x128xbf16, #tpu.memory_space<vmem>>, %arg4: memref<8x128xf32, #tpu.memory_space<vmem>>, %arg5: memref<8x128xf32, #tpu.memory_space<vmem>>) attributes {dimension_semantics = [#tpu.dimension_semantics<parallel>, #tpu.dimension_semantics<arbitrary>], iteration_bounds = array<i64: 1, 1>, scalar_prefetch = 0 : i64, scratch_operands = 1 : i64, tpu.core_type = #tpu.core_type<tc>, window_params = [{transform_indices = @transform_0, window_bounds = array<i64: 8, 2, 128>}, {pipeline_mode = #tpu.pipeline_mode<synchronous>, transform_indices = @transform_1, window_bounds = array<i64: 128, 128>}, {transform_indices = @transform_2, window_bounds = array<i64: 8, 128>}]} {
    %c0_i32 = arith.constant 0 : i32
    %0 = arith.cmpi eq, %arg1, %c0_i32 : i32
    %1 = arith.extui %0 : i1 to i32
    %c0_i32_0 = arith.constant 0 : i32
    %2 = arith.cmpi ne, %1, %c0_i32_0 : i32
    scf.if %2 {
      %cst_14 = arith.constant 0.000000e+00 : f32
      %23 = vector.broadcast %cst_14 : f32 to vector<8x128xf32>
      %c0_15 = arith.constant 0 : index
      %c0_16 = arith.constant 0 : index
      %24 = vector.load %arg5[%c0_15, %c0_16] : memref<8x128xf32, #tpu.memory_space<vmem>>, vector<8x128xf32>
      tpu.vector_store %arg5[%c0_15, %c0_16], %23 {strides = array<i32>} : memref<8x128xf32, #tpu.memory_space<vmem>>, vector<8x128xf32>,
    } else {
    }
    %c0 = arith.constant 0 : index
    %c0_1 = arith.constant 0 : index
    %c0_2 = arith.constant 0 : index
    %3 = vector.load %arg2[%c0, %c0_1, %c0_2] : memref<8x2x128xbf16, #tpu.memory_space<vmem>>, vector<8x2x128xbf16>
    %4 = vector.shape_cast %3 : vector<8x2x128xbf16> to vector<16x128xbf16>
    %c0_3 = arith.constant 0 : index
    %c0_4 = arith.constant 0 : index
    %5 = vector.load %arg3[%c0_3, %c0_4] : memref<128x128xbf16, #tpu.memory_space<vmem>>, vector<128x128xbf16>
    %cst = arith.constant dense<0.000000e+00> : vector<16x128xf32>
    %6 = tpu.matmul %4, %5, %cst {dimension_numbers = #tpu.dot_dimension_numbers<[1], [0], [0], [1], [0, 0, 1, 1], [], []>} : vector<16x128xbf16>, vector<128x128xbf16>, vector<16x128xf32> -> vector<16x128xf32>
    %7 = arith.mulf %6, %6 : vector<16x128xf32>
    %cst_5 = arith.constant dense<0.000000e+00> : vector<16xf32>
    %8 = vector.multi_reduction <add>, %7, %cst_5 [1] : vector<16x128xf32> to vector<16xf32>
    %9 = vector.shape_cast %8 : vector<16xf32> to vector<16x1xf32>
    %cst_6 = arith.constant 1.000000e-30 : f32
    %10 = vector.broadcast %cst_6 : f32 to vector<16x1xf32>
    %11 = arith.maximumf %9, %10 : vector<16x1xf32>
    %12 = math.rsqrt %11 : vector<16x1xf32>
    %c0_7 = arith.constant 0 : index
    %c0_8 = arith.constant 0 : index
    %13 = vector.load %arg5[%c0_7, %c0_8] : memref<8x128xf32, #tpu.memory_space<vmem>>, vector<8x128xf32>
    %14 = vector.broadcast %12 : vector<16x1xf32> to vector<16x128xf32>
    %15 = arith.mulf %6, %14 : vector<16x128xf32>
    %16 = vector.shape_cast %15 : vector<16x128xf32> to vector<8x2x128xf32>
    %cst_9 = arith.constant dense<0.000000e+00> : vector<8x128xf32>
    %17 = vector.multi_reduction <add>, %16, %cst_9 [1] : vector<8x2x128xf32> to vector<8x128xf32>
    %18 = arith.addf %13, %17 : vector<8x128xf32>
    %c0_10 = arith.constant 0 : index
    %c0_11 = arith.constant 0 : index
    %19 = vector.load %arg5[%c0_10, %c0_11] : memref<8x128xf32, #tpu.memory_space<vmem>>, vector<8x128xf32>
    tpu.vector_store %arg5[%c0_10, %c0_11], %18 {strides = array<i32>} : memref<8x128xf32, #tpu.memory_space<vmem>>, vector<8x128xf32>,
    %c0_i32_12 = arith.constant 0 : i32
    %20 = arith.cmpi eq, %arg1, %c0_i32_12 : i32
    %21 = arith.extui %20 : i1 to i32
    %c0_i32_13 = arith.constant 0 : i32
    %22 = arith.cmpi ne, %21, %c0_i32_13 : i32
    scf.if %22 {
      %c0_14 = arith.constant 0 : index
      %c0_15 = arith.constant 0 : index
      %23 = vector.load %arg5[%c0_14, %c0_15] : memref<8x128xf32, #tpu.memory_space<vmem>>, vector<8x128xf32>
      %24 = arith.mulf %23, %23 : vector<8x128xf32>
      %cst_16 = arith.constant dense<0.000000e+00> : vector<8xf32>
      %25 = vector.multi_reduction <add>, %24, %cst_16 [1] : vector<8x128xf32> to vector<8xf32>
      %26 = vector.shape_cast %25 : vector<8xf32> to vector<8x1xf32>
      %cst_17 = arith.constant 1.000000e-30 : f32
      %27 = vector.broadcast %cst_17 : f32 to vector<8x1xf32>
      %28 = arith.maximumf %26, %27 : vector<8x1xf32>
      %29 = math.rsqrt %28 : vector<8x1xf32>
      %30 = vector.broadcast %29 : vector<8x1xf32> to vector<8x128xf32>
      %31 = arith.mulf %23, %30 : vector<8x128xf32>
      %c0_18 = arith.constant 0 : index
      %c0_19 = arith.constant 0 : index
      %32 = vector.load %arg4[%c0_18, %c0_19] : memref<8x128xf32, #tpu.memory_space<vmem>>, vector<8x128xf32>
      tpu.vector_store %arg4[%c0_18, %c0_19], %31 {strides = array<i32>} : memref<8x128xf32, #tpu.memory_space<vmem>>, vector<8x128xf32>,
    } else {
    }
    return
  }
  func.func @transform_0(%arg0: i32, %arg1: i32) -> (i32, i32, i32) {
    %c0_i32 = arith.constant 0 : i32
    %c0_i32_0 = arith.constant 0 : i32
    return %arg0, %arg1, %c0_i32 : i32, i32, i32
  }
  func.func @transform_1(%arg0: i32, %arg1: i32) -> (i32, i32) {
    %c0_i32 = arith.constant 0 : i32
    %c0_i32_0 = arith.constant 0 : i32
    %c0_i32_1 = arith.constant 0 : i32
    return %c0_i32, %c0_i32_0 : i32, i32
  }
  func.func @transform_2(%arg0: i32, %arg1: i32) -> (i32, i32) {
    %c0_i32 = arith.constant 0 : i32
    %c0_i32_0 = arith.constant 0 : i32
    return %arg0, %c0_i32 : i32, i32
  }
}

</mosaic_0001>

<llo_original>
// kernel: prompt_extractor_forward.1
$region0: #{prompt_extractor_forward.1}
  #allocation0 [shape = 'u32[]', space=smem, size = 0x4, offset = 0x4, fixed_abs, tag = 'smem constant byte address 0x4 - core index']
  #allocation1 [shape = 'u32[72,128]{1,0:T(1,128)}', space=vmem, size = 0x9000, scoped, tag = 'internal scratch']
  #allocation2 [shape = 'f32[8,128]{1,0:T(8,128)}', space=vmem, size = 0x1000, scoped, tag = 'scratch operand']
  %s0 = inlined_call_operand.vmem [shape: bf16[8,2,128], index: 0, kind: input, shape index: {}]
  %s1 = inlined_call_operand.vmem [shape: bf16[128,128], index: 1, kind: input, shape index: {}]
  %s2 = inlined_call_operand.hbm [shape: f32[8,128], index: 2, kind: output, shape index: {}]
  %s3 = sld [smem:[#allocation0]]
  $region26: #{prompt_extractor_forward.1} parent=0
    _
  %s5 = ssub.s32 1, %s3
  %s6 = scalar_select 0, %s5, %s3
  $region1: #{prompt_extractor_forward.1} parent=0
    #allocation3 [shape = 'u8[4096]{0}', space=vmem, size = 0x1000, scoped, tag = 'output window, operand 0, single buffered']
    #allocation4 [shape = 's32[1]{0}', space=sflag, size = 0x4, scoped, tag = 'scoped memory for prompt_extractor_forward.1']
    %7 = vsyncpa [#allocation4], 0
    // Predicated region
    $region2: #{prompt_extractor_forward.1} parent=1 // pred_check
      _
    $region3: #{prompt_extractor_forward.1} parent=1 // pred_check_branch
      %9 = sbr.rel (0) target = $region5
    $region4: #{prompt_extractor_forward.1} parent=1 // pred_region
      _
    $region5: #{prompt_extractor_forward.1} parent=1 // pred_fallthru
      _
    // Predicated region
    $region6: #{prompt_extractor_forward.1} parent=1 // pred_check
      _
    $region7: #{prompt_extractor_forward.1} parent=1 // pred_check_branch
      %11 = sbr.rel (0) target = $region9
    $region8: #{prompt_extractor_forward.1} parent=1 // pred_region
      _
    $region9: #{prompt_extractor_forward.1} parent=1 // pred_fallthru
      _
    %p12 = scmp.eq.s32.totalorder 0, 0
    // Predicated region
    $region10: #{prompt_extractor_forward.1} parent=1 // pred_check
      %p13 = pneg %p12
    $region11: #{prompt_extractor_forward.1} parent=1 // pred_check_branch
      %15 = sbr.rel (%p13) target = $region13
    $region12: #{prompt_extractor_forward.1} parent=1 // pred_region
      %16 = vst [vmem:[#allocation2] sm:$0xff] 0.0
    $region13: #{prompt_extractor_forward.1} parent=1 // pred_fallthru
      _
    %v17 = vld [vmem:[%s0] sm:$0x1]
    %v18 = vld [vmem:[%s0 + $0x1] sm:$0x1]
    %v19 = vld [vmem:[%s0 + $0x2] sm:$0x1]
    %v20 = vld [vmem:[%s0 + $0x3] sm:$0x1]
    %v21 = vld [vmem:[%s0 + $0x4] sm:$0x1]
    %v22 = vld [vmem:[%s0 + $0x5] sm:$0x1]
    %v23 = vld [vmem:[%s0 + $0x6] sm:$0x1]
    %v24 = vld [vmem:[%s0 + $0x7] sm:$0x1]
    %v25 = vld [vmem:[%s1] sm:$0xf]
    %v26 = vld [vmem:[%s1 + $0x4] sm:$0xf]
    %v27 = vld [vmem:[%s1 + $0x8] sm:$0xf]
    %v28 = vld [vmem:[%s1 + $0xc] sm:$0xf]
    %v29 = vld [vmem:[%s1 + $0x10] sm:$0xf]
    %v30 = vld [vmem:[%s1 + $0x14] sm:$0xf]
    %v31 = vld [vmem:[%s1 + $0x18] sm:$0xf]
    %v32 = vld [vmem:[%s1 + $0x1c] sm:$0xf]
    %v33 = vld [vmem:[%s1 + $0x20] sm:$0xf]
    %v34 = vld [vmem:[%s1 + $0x24] sm:$0xf]
    %v35 = vld [vmem:[%s1 + $0x28] sm:$0xf]
    %v36 = vld [vmem:[%s1 + $0x2c] sm:$0xf]
    %v37 = vld [vmem:[%s1 + $0x30] sm:$0xf]
    %v38 = vld [vmem:[%s1 + $0x34] sm:$0xf]
    %v39 = vld [vmem:[%s1 + $0x38] sm:$0xf]
    %v40 = vld [vmem:[%s1 + $0x3c] sm:$0xf]
    %42 = vst [vmem:[#allocation1] ss:$9 sm:$0xff] %v17
    %s44 = scalar_lea.vmem [#allocation1], 1
    %45 = vst [vmem:[%s44] ss:$9 sm:$0xff] %v18
    %s47 = scalar_lea.vmem [#allocation1], 2
    %48 = vst [vmem:[%s47] ss:$9 sm:$0xff] %v19
    %s50 = scalar_lea.vmem [#allocation1], 3
    %51 = vst [vmem:[%s50] ss:$9 sm:$0xff] %v20
    %s53 = scalar_lea.vmem [#allocation1], 4
    %54 = vst [vmem:[%s53] ss:$9 sm:$0xff] %v21
    %s56 = scalar_lea.vmem [#allocation1], 5
    %57 = vst [vmem:[%s56] ss:$9 sm:$0xff] %v22
    %s59 = scalar_lea.vmem [#allocation1], 6
    %60 = vst [vmem:[%s59] ss:$9 sm:$0xff] %v23
    %s62 = scalar_lea.vmem [#allocation1], 7
    %63 = vst [vmem:[%s62] ss:$9 sm:$0xff] %v24
    %v64 = vld [vmem:[#allocation1] sm:$0xff]
    %v82 = vunpack.c.l.b16 %v25
    %v83 = vunpack.c.l.b16 %v26
    %v84 = vunpack.c.l.b16 %v27
    %v85 = vunpack.c.l.b16 %v28
    %v86 = vunpack.c.l.b16 %v29
    %v87 = vunpack.c.l.b16 %v30
    %v88 = vunpack.c.l.b16 %v31
    %v89 = vunpack.c.l.b16 %v32
    %v90 = vunpack.c.l.b16 %v33
    %v91 = vunpack.c.l.b16 %v34
    %v92 = vunpack.c.l.b16 %v35
    %v93 = vunpack.c.l.b16 %v36
    %v94 = vunpack.c.l.b16 %v37
    %v95 = vunpack.c.l.b16 %v38
    %v96 = vunpack.c.l.b16 %v39
    %v97 = vunpack.c.l.b16 %v40
    %v98 = vpack.c.b16 %v83, %v82
    %v99 = vpack.c.b16 %v85, %v84
    %v100 = vpack.c.b16 %v87, %v86
    %v101 = vpack.c.b16 %v89, %v88
    %v102 = vpack.c.b16 %v91, %v90
    %v103 = vpack.c.b16 %v93, %v92
    %v104 = vpack.c.b16 %v95, %v94
    %v105 = vpack.c.b16 %v97, %v96
    %114 = vmatpush.bf16.msra.mxu0 %v105
    %115 = vmatpush.bf16.msra.mxu0 %v104
    %116 = vmatpush.bf16.msra.mxu0 %v103
    %117 = vmatpush.bf16.msra.mxu0 %v102
    %118 = vmatpush.bf16.msra.mxu0 %v101
    %119 = vmatpush.bf16.msra.mxu0 %v100
    %120 = vmatpush.bf16.msra.mxu0 %v99
    %121 = vmatpush.bf16.msra.mxu0 %v98
    %122 = vmatmul.bf16.gmra.mxu0 %v64
    %v123 = vpop.f32.mrf.mxu0
    %v124 = vadd.f32 0.0, %v123
    %v125 = vpop.f32.mrf.mxu0
    %v126 = vadd.f32 0.0, %v125
    %127 = vdwg.mxu0
    %v128 = vmul.f32 %v124, %v124
    %v129 = vmul.f32 %v126, %v126
    %130 = vadd.xlane.f32.xlu0 %v128
    %v131 = vpop.xlane.xlu0 %130
    %132 = vadd.xlane.f32.xlu0 %v129
    %v133 = vpop.xlane.xlu0 %132
    %v134 = vmax.f32 %v131, 1e-30
    %v135 = vmax.f32 %v133, 1e-30
    %v136 = vrsqrt.pop %v134
    %v137 = vmul.f32 %v136, %v134
    %v138 = vmul.f32 %v137, %v136
    %v139 = vmul.f32 0.5, %v138
    %v140 = vsub.f32 1.5, %v139
    %v141 = vmul.f32 %v136, %v140
    %vm142 = vweird.f32 %v134
    %vm143 = vweird.f32 %v136
    %vm144 = vmor %vm142, %vm143
    %v145 = vsel %vm144, %v136, %v141
    %v146 = vrsqrt.pop %v135
    %v147 = vmul.f32 %v146, %v135
    %v148 = vmul.f32 %v147, %v146
    %v149 = vmul.f32 0.5, %v148
    %v150 = vsub.f32 1.5, %v149
    %v151 = vmul.f32 %v146, %v150
    %vm152 = vweird.f32 %v135
    %vm153 = vweird.f32 %v146
    %vm154 = vmor %vm152, %vm153
    %v155 = vsel %vm154, %v146, %v151
    %v156 = vld [vmem:[#allocation2] sm:$0xff]
    %v157 = vmul.f32 %v124, %v145
    %v158 = vmul.f32 %v126, %v155
    %v161 = vrot.slane %v157, 2
    %v162 = vrot.slane %v157, 4
    %v163 = vrot.slane %v157, 6
    %v164 = vrot.slane %v158, 2
    %v165 = vrot.slane %v158, 4
    %v166 = vrot.slane %v158, 6
    %vm173 = vcmask 1041408
    %v174 = vsel %vm173, %v157, 0.0
    %v175 = vrot.slane %v174, 4
    %v176 = vadd.f32 %v174, %v175
    %v177 = vrot.slane %v176, 2
    %v178 = vadd.f32 %v176, %v177
    %v179 = vrot.slane %v178, 1
    %v180 = vadd.f32 %v178, %v179
    %v181 = vsel %vm173, %v161, 0.0
    %v182 = vrot.slane %v181, 4
    %v183 = vadd.f32 %v181, %v182
    %v184 = vrot.slane %v183, 2
    %v185 = vadd.f32 %v183, %v184
    %v186 = vrot.slane %v185, 1
    %v187 = vadd.f32 %v185, %v186
    %v188 = vsel %vm173, %v162, 0.0
    %v189 = vrot.slane %v188, 4
    %v190 = vadd.f32 %v188, %v189
    %v191 = vrot.slane %v190, 2
    %v192 = vadd.f32 %v190, %v191
    %v193 = vrot.slane %v192, 1
    %v194 = vadd.f32 %v192, %v193
    %v195 = vsel %vm173, %v163, 0.0
    %v196 = vrot.slane %v195, 4
    %v197 = vadd.f32 %v195, %v196
    %v198 = vrot.slane %v197, 2
    %v199 = vadd.f32 %v197, %v198
    %v200 = vrot.slane %v199, 1
    %v201 = vadd.f32 %v199, %v200
    %v202 = vsel %vm173, %v158, 0.0
    %v203 = vrot.slane %v202, 4
    %v204 = vadd.f32 %v202, %v203
    %v205 = vrot.slane %v204, 2
    %v206 = vadd.f32 %v204, %v205
    %v207 = vrot.slane %v206, 1
    %v208 = vadd.f32 %v206, %v207
    %v209 = vsel %vm173, %v164, 0.0
    %v210 = vrot.slane %v209, 4
    %v211 = vadd.f32 %v209, %v210
    %v212 = vrot.slane %v211, 2
    %v213 = vadd.f32 %v211, %v212
    %v214 = vrot.slane %v213, 1
    %v215 = vadd.f32 %v213, %v214
    %v216 = vsel %vm173, %v165, 0.0
    %v217 = vrot.slane %v216, 4
    %v218 = vadd.f32 %v216, %v217
    %v219 = vrot.slane %v218, 2
    %v220 = vadd.f32 %v218, %v219
    %v221 = vrot.slane %v220, 1
    %v222 = vadd.f32 %v220, %v221
    %v223 = vsel %vm173, %v166, 0.0
    %v224 = vrot.slane %v223, 4
    %v225 = vadd.f32 %v223, %v224
    %v226 = vrot.slane %v225, 2
    %v227 = vadd.f32 %v225, %v226
    %v228 = vrot.slane %v227, 1
    %v229 = vadd.f32 %v227, %v228
    %vm238 = vcmask 1041409
    %v239 = vsel %vm238, %v187, %v180
    %vm240 = vcmask 1042434
    %v241 = vsel %vm240, %v194, %v239
    %vm242 = vcmask 1043459
    %v243 = vsel %vm242, %v201, %v241
    %vm244 = vcmask 1044484
    %v245 = vsel %vm244, %v208, %v243
    %vm246 = vcmask 1045509
    %v247 = vsel %vm246, %v215, %v245
    %vm248 = vcmask 1046534
    %v249 = vsel %vm248, %v222, %v247
    %vm250 = vcmask 1047559
    %v251 = vsel %vm250, %v229, %v249
    %v253 = vadd.f32 %v156, %v251
    %254 = vst [vmem:[#allocation2] sm:$0xff] %v253
    // Predicated region
    $region14: #{prompt_extractor_forward.1} parent=1 // pred_check
      %p255 = pneg %p12
    $region15: #{prompt_extractor_forward.1} parent=1 // pred_check_branch
      %257 = sbr.rel (%p255) target = $region17
    $region16: #{prompt_extractor_forward.1} parent=1 // pred_region
      %v258 = vld [vmem:[#allocation2] sm:$0xff]
      %v259 = vmul.f32 %v258, %v258
      %260 = vadd.xlane.f32.xlu0 %v259
      %v261 = vpop.xlane.xlu0 %260
      %v262 = vmax.f32 %v261, 1e-30
      %v263 = vrsqrt.pop %v262
      %v264 = vmul.f32 %v263, %v262
      %v265 = vmul.f32 %v264, %v263
      %v266 = vmul.f32 0.5, %v265
      %v267 = vsub.f32 1.5, %v266
      %v268 = vmul.f32 %v263, %v267
      %vm269 = vweird.f32 %v262
      %vm270 = vweird.f32 %v263
      %vm271 = vmor %vm269, %vm270
      %v272 = vsel %vm271, %v263, %v268
      %v273 = vmul.f32 %v258, %v272
      %274 = vst [vmem:[#allocation3] sm:$0xff] %v273
    $region17: #{prompt_extractor_forward.1} parent=1 // pred_fallthru
      _
    // Predicated region
    $region18: #{prompt_extractor_forward.1} parent=1 // pred_check
      _
    $region19: #{prompt_extractor_forward.1} parent=1 // pred_check_branch
      %276 = sbr.rel (0) target = $region21
    $region20: #{prompt_extractor_forward.1} parent=1 // pred_region
      %278 = vsyncadd [#allocation4], 0
      %s280 = sshll.u32 [#allocation3], 4
      %s281 = int_to_ptr.vmem [resolvable:$true] %s280
      %s282 = sshll.u32 %s2, 4
      %s283 = int_to_ptr.hbm [resolvable:$true] %s282
      %285 = dma.vmem_to_hbm [thread:$0]  %s281, 128, %s283, [#allocation4]
    $region21: #{prompt_extractor_forward.1} parent=1 // pred_fallthru
      _
    // Predicated region
    $region22: #{prompt_extractor_forward.1} parent=1 // pred_check
      _
    $region23: #{prompt_extractor_forward.1} parent=1 // pred_check_branch
      %287 = sbr.rel (0) target = $region25
    $region24: #{prompt_extractor_forward.1} parent=1 // pred_region
      %289 = dma.done [#allocation4], 128
    $region25: #{prompt_extractor_forward.1} parent=1 // pred_fallthru
      _
    %290 = vsyncpa [#allocation4], 1

</llo_original>
